<compile_context>
chip_gen: v7x
topology: tpu7x:2x2x1
jax: 0.10.0
libtpu: 0.0.40
codegen_flags: <defaults>
</compile_context>

<pallas_src>
import functools

import jax
import jax.numpy as jnp
from jax.experimental import pallas as pl
from jax.experimental.pallas import tpu as pltpu


def _cdiv(a, b):
    return (a + b - 1) // b


def _round_up(a, b):
    return _cdiv(a, b) * b


def _distill_kernel(x_ref, w_ref, b_ref, mask_ref, loss_ref, acc_ref, *,
                    num_classes, loss_func):
    """One class-major token tile: fused teacher+student heads + masked loss."""
    j = pl.program_id(1)                      # reduction (token-tile) axis

    @pl.when(j == 0)
    def _():
        acc_ref[...] = jnp.zeros_like(acc_ref)

    # One fused MXU call: block-diag weights [2C, 2H] @ [2H, tm] -> [2C, tm].
    logits = jnp.dot(w_ref[...], x_ref[...],
                     preferred_element_type=jnp.float32) + b_ref[...]
    c = num_classes
    t_logits = logits[:c, :]                  # [C, tm] teacher (classes on sublanes)
    s_logits = logits[c:, :]                  # [C, tm] student (tokens on lanes)

    # Numerically stable (log-)softmax over the class (sublane) axis.
    t_shift = t_logits - jnp.max(t_logits, axis=0, keepdims=True)
    s_shift = s_logits - jnp.max(s_logits, axis=0, keepdims=True)
    t_exp = jnp.exp(t_shift)
    s_exp = jnp.exp(s_shift)
    t_sum = jnp.sum(t_exp, axis=0, keepdims=True)       # [1, tm]
    s_sum = jnp.sum(s_exp, axis=0, keepdims=True)

    # approx=True -> EUP vrcp slot (otherwise idle); probs only weight the loss.
    t_p = t_exp * pl.reciprocal(t_sum, approx=True)
    if loss_func == 'mse':
        s_p = s_exp * pl.reciprocal(s_sum, approx=True)
        losses = jnp.sum((t_p - s_p) ** 2, axis=0, keepdims=True)        # [1, tm]
    else:
        # KL-style in log space: sum_c p_t * (logp_t - logp_s); avoids 0*log(0).
        t_logp = t_shift - jnp.log(t_sum)
        s_logp = s_shift - jnp.log(s_sum)
        losses = jnp.sum(t_p * (t_logp - s_logp), axis=0, keepdims=True)

    # masked_select(losses, predict_mask).sum() == sum(losses * mask); lane-dense.
    acc_ref[...] += jnp.sum(losses * mask_ref[...], axis=1, keepdims=True)

    @pl.when(j == pl.num_programs(1) - 1)
    def _():
        # Lane-dense (1,1,128) store, once per core slice.
        loss_ref[...] = jnp.broadcast_to(acc_ref[...].reshape(1, 1, 1),
                                         loss_ref.shape)


def distillation_loss(xt, xs, wt, bt, ws, bs, predict_mask, *,
                      loss_func='mse', tm_max=512, num_cores=2):
    """xt, xs: [N, H] embedded teacher/student tokens; wt, ws: [H, C];
       bt, bs: [1, C] (or [C]); predict_mask: [N] bool."""
    n, h = xt.shape
    c = wt.shape[-1]

    # --- class-major fused parameters -------------------------------------
    w_cm = jnp.zeros((2 * c, 2 * h), xt.dtype)
    w_cm = w_cm.at[:c, :h].set(wt.T)
    w_cm = w_cm.at[c:, h:].set(ws.T)
    b_cm = jnp.concatenate([bt.reshape(c, 1), bs.reshape(c, 1)], axis=0)   # [2C, 1]

    # --- tile / grid sizing -------------------------------------------------
    # Lane-dense tile (multiple of 128), big enough to amortize ~0.35us/step.
    tm = min(tm_max, _round_up(_cdiv(n, num_cores), 128))
    n_tiles = _cdiv(n, num_cores * tm)          # inner (arbitrary/reduction) extent
    n_pad = num_cores * n_tiles * tm

    # --- class-major, padded inputs (padding rows have mask 0) --------------
    x_cat = jnp.concatenate([xt, xs], axis=1)                      # [N, 2H]
    x_cat = jnp.pad(x_cat, ((0, n_pad - n), (0, 0)))
    x_cm = x_cat.T                                                 # [2H, n_pad]
    mask_cm = jnp.pad(predict_mask.astype(jnp.float32).reshape(1, n),
                      ((0, 0), (0, n_pad - n)))                    # [1, n_pad]

    kernel = functools.partial(_distill_kernel, num_classes=c,
                               loss_func=loss_func)

    partials = pl.pallas_call(
        kernel,
        out_shape=jax.ShapeDtypeStruct((num_cores, 1, 128), jnp.float32),
        grid_spec=pltpu.PrefetchScalarGridSpec(
            num_scalar_prefetch=0,
            grid=(num_cores, n_tiles),
            in_specs=[
                # [2H, tm] token tile (tokens on lanes)
                pl.BlockSpec((2 * h, tm), lambda ci, j: (0, ci * n_tiles + j)),
                # fused block-diagonal weights / bias, resident
                pl.BlockSpec((2 * c, 2 * h), lambda ci, j: (0, 0)),
                pl.BlockSpec((2 * c, 1), lambda ci, j: (0, 0)),
                # lane-dense predict mask
                pl.BlockSpec((1, tm), lambda ci, j: (0, ci * n_tiles + j)),
            ],
            # per-core partial loss, written once on the last reduction step
            out_specs=pl.BlockSpec((1, 1, 128), lambda ci, j: (ci, 0, 0)),
            scratch_shapes=[pltpu.VMEM((1, 1), jnp.float32)],
        ),
        compiler_params=pltpu.CompilerParams(
            dimension_semantics=("parallel", "arbitrary"),
            # Explicit budget: safe on v7x (64 MiB physical) and v5e/v6e.
            vmem_limit_bytes=48 * 1024 * 1024,
        ),
    )(x_cm, w_cm, b_cm, mask_cm)

    return jnp.sum(partials[:, 0, 0])


def reference_loss(xt, xs, wt, bt, ws, bs, predict_mask, loss_func='mse'):
    teacher_p = jax.nn.softmax(xt @ wt + bt.reshape(1, -1), axis=-1)
    student_p = jax.nn.softmax(xs @ ws + bs.reshape(1, -1), axis=-1)
    if loss_func == 'mse':
        losses = jnp.sum((teacher_p - student_p) ** 2, axis=-1)
    else:
        losses = jnp.sum(teacher_p * jnp.log(teacher_p)
                         - teacher_p * jnp.log(student_p), axis=-1)
    return jnp.sum(jnp.where(predict_mask, losses, 0.0))


if __name__ == "__main__":
    B, S = 2, 8          # batch, sequence length
    V, H, C = 16, 32, 8  # vocab, hidden, num labels
    N = B * S

    key = jax.random.PRNGKey(0)
    keys = jax.random.split(key, 9)

    # Deterministic synthetic parameters (teacher & student taggers).
    t_emb = jax.random.normal(keys[0], (V, H), jnp.float32) * 0.1
    s_emb = jax.random.normal(keys[1], (V, H), jnp.float32) * 0.1
    wt = jax.random.normal(keys[2], (H, C), jnp.float32) * 0.2
    bt = jax.random.normal(keys[3], (1, C), jnp.float32) * 0.1
    ws = jax.random.normal(keys[4], (H, C), jnp.float32) * 0.2
    bs = jax.random.normal(keys[5], (1, C), jnp.float32) * 0.1

    # Inputs.
    input_ids = jax.random.randint(keys[6], (B, S), 0, V)
    perturbed_input_ids = jax.random.randint(keys[7], (B, S), 0, V)
    input_mask = jnp.ones((B, S), jnp.int32)          # accepted, unused (see TODO)
    predict_mask = jax.random.bernoulli(keys[8], 0.5, (B, S))

    # Glue: embedding lookups + flatten tokens (gather stays in plain JAX).
    xt = t_emb[input_ids].reshape(N, H)
    xs = s_emb[perturbed_input_ids].reshape(N, H)
    pm = predict_mask.reshape(N)

    for lf in ("mse", "kl"):
        loss = distillation_loss(xt, xs, wt, bt, ws, bs, pm, loss_func=lf)
        loss = jax.block_until_ready(loss)
        ref = reference_loss(xt, xs, wt, bt, ws, bs, pm, loss_func=lf)
        # Tolerance accounts for approx EUP reciprocal and default MXU precision.
        assert jnp.allclose(loss, ref, rtol=5e-2, atol=1e-3), (lf, loss, ref)

    print("KERNEL_OK")
</pallas_src>

<mosaic_0001>
module attributes {stable_mosaic.version = 11 : i64} {
  func.func @_distill_kernel(%arg0: i32, %arg1: i32, %arg2: memref<64x128xf32, #tpu.memory_space<vmem>>, %arg3: memref<16x64xf32, #tpu.memory_space<vmem>>, %arg4: memref<16x1xf32, #tpu.memory_space<vmem>>, %arg5: memref<1x128xf32, #tpu.memory_space<vmem>>, %arg6: memref<1x1x128xf32, #tpu.memory_space<vmem>>, %arg7: memref<1x1xf32, #tpu.memory_space<vmem>>) attributes {dimension_semantics = [#tpu.dimension_semantics<parallel>, #tpu.dimension_semantics<arbitrary>], iteration_bounds = array<i64: 2, 1>, scalar_prefetch = 0 : i64, scratch_operands = 1 : i64, tpu.core_type = #tpu.core_type<tc>, window_params = [{transform_indices = @transform_0, window_bounds = array<i64: 64, 128>}, {pipeline_mode = #tpu.pipeline_mode<synchronous>, transform_indices = @transform_1, window_bounds = array<i64: 16, 64>}, {pipeline_mode = #tpu.pipeline_mode<synchronous>, transform_indices = @transform_2, window_bounds = array<i64: 16, 1>}, {transform_indices = @transform_3, window_bounds = array<i64: 1, 128>}, {transform_indices = @transform_4, window_bounds = array<i64: 1, 1, 128>}]} {
    %c0_i32 = arith.constant 0 : i32
    %0 = arith.cmpi eq, %arg1, %c0_i32 : i32
    %1 = arith.extui %0 : i1 to i32
    %c0_i32_0 = arith.constant 0 : i32
    %2 = arith.cmpi ne, %1, %c0_i32_0 : i32
    scf.if %2 {
      %cst_20 = arith.constant 0.000000e+00 : f32
      %45 = vector.broadcast %cst_20 : f32 to vector<1x1xf32>
      %c0_21 = arith.constant 0 : index
      %c0_22 = arith.constant 0 : index
      %46 = vector.load %arg7[%c0_21, %c0_22] : memref<1x1xf32, #tpu.memory_space<vmem>>, vector<1x1xf32>
      tpu.vector_store %arg7[%c0_21, %c0_22], %45 {strides = array<i32>} : memref<1x1xf32, #tpu.memory_space<vmem>>, vector<1x1xf32>,
    } else {
    }
    %c0 = arith.constant 0 : index
    %c0_1 = arith.constant 0 : index
    %3 = vector.load %arg3[%c0, %c0_1] : memref<16x64xf32, #tpu.memory_space<vmem>>, vector<16x64xf32>
    %c0_2 = arith.constant 0 : index
    %c0_3 = arith.constant 0 : index
    %4 = vector.load %arg2[%c0_2, %c0_3] : memref<64x128xf32, #tpu.memory_space<vmem>>, vector<64x128xf32>
    %cst = arith.constant dense<0.000000e+00> : vector<16x128xf32>
    %5 = tpu.matmul %3, %4, %cst {dimension_numbers = #tpu.dot_dimension_numbers<[1], [0], [0], [1], [0, 0, 1, 1], [], []>} : vector<16x64xf32>, vector<64x128xf32>, vector<16x128xf32> -> vector<16x128xf32>
    %c0_4 = arith.constant 0 : index
    %c0_5 = arith.constant 0 : index
    %6 = vector.load %arg4[%c0_4, %c0_5] : memref<16x1xf32, #tpu.memory_space<vmem>>, vector<16x1xf32>
    %7 = vector.broadcast %6 : vector<16x1xf32> to vector<16x128xf32>
    %8 = arith.addf %5, %7 : vector<16x128xf32>
    %9 = vector.extract_strided_slice %8 {offsets = [0, 0], sizes = [8, 128], strides = [1, 1]} : vector<16x128xf32> to vector<8x128xf32>
    %10 = vector.extract_strided_slice %8 {offsets = [8, 0], sizes = [8, 128], strides = [1, 1]} : vector<16x128xf32> to vector<8x128xf32>
    %cst_6 = arith.constant dense<0xFF800000> : vector<128xf32>
    %11 = vector.multi_reduction <maximumf>, %9, %cst_6 [0] : vector<8x128xf32> to vector<128xf32>
    %12 = vector.shape_cast %11 : vector<128xf32> to vector<1x128xf32>
    %13 = vector.broadcast %12 : vector<1x128xf32> to vector<8x128xf32>
    %14 = arith.subf %9, %13 : vector<8x128xf32>
    %cst_7 = arith.constant dense<0xFF800000> : vector<128xf32>
    %15 = vector.multi_reduction <maximumf>, %10, %cst_7 [0] : vector<8x128xf32> to vector<128xf32>
    %16 = vector.shape_cast %15 : vector<128xf32> to vector<1x128xf32>
    %17 = vector.broadcast %16 : vector<1x128xf32> to vector<8x128xf32>
    %18 = arith.subf %10, %17 : vector<8x128xf32>
    %19 = math.exp %14 : vector<8x128xf32>
    %20 = math.exp %18 : vector<8x128xf32>
    %cst_8 = arith.constant dense<0.000000e+00> : vector<128xf32>
    %21 = vector.multi_reduction <add>, %19, %cst_8 [0] : vector<8x128xf32> to vector<128xf32>
    %22 = vector.shape_cast %21 : vector<128xf32> to vector<1x128xf32>
    %cst_9 = arith.constant dense<0.000000e+00> : vector<128xf32>
    %23 = vector.multi_reduction <add>, %20, %cst_9 [0] : vector<8x128xf32> to vector<128xf32>
    %24 = vector.shape_cast %23 : vector<128xf32> to vector<1x128xf32>
    %25 = tpu.reciprocal %22 {approx = true} : vector<1x128xf32> -> vector<1x128xf32>
    %26 = vector.broadcast %25 : vector<1x128xf32> to vector<8x128xf32>
    %27 = arith.mulf %19, %26 : vector<8x128xf32>
    %28 = tpu.reciprocal %24 {approx = true} : vector<1x128xf32> -> vector<1x128xf32>
    %29 = vector.broadcast %28 : vector<1x128xf32> to vector<8x128xf32>
    %30 = arith.mulf %20, %29 : vector<8x128xf32>
    %31 = arith.subf %27, %30 : vector<8x128xf32>
    %32 = arith.mulf %31, %31 : vector<8x128xf32>
    %cst_10 = arith.constant dense<0.000000e+00> : vector<128xf32>
    %33 = vector.multi_reduction <add>, %32, %cst_10 [0] : vector<8x128xf32> to vector<128xf32>
    %34 = vector.shape_cast %33 : vector<128xf32> to vector<1x128xf32>
    %c0_11 = arith.constant 0 : index
    %c0_12 = arith.constant 0 : index
    %35 = vector.load %arg7[%c0_11, %c0_12] : memref<1x1xf32, #tpu.memory_space<vmem>>, vector<1x1xf32>
    %c0_13 = arith.constant 0 : index
    %c0_14 = arith.constant 0 : index
    %36 = vector.load %arg5[%c0_13, %c0_14] : memref<1x128xf32, #tpu.memory_space<vmem>>, vector<1x128xf32>
    %37 = arith.mulf %34, %36 : vector<1x128xf32>
    %cst_15 = arith.constant dense<0.000000e+00> : vector<1xf32>
    %38 = vector.multi_reduction <add>, %37, %cst_15 [1] : vector<1x128xf32> to vector<1xf32>
    %39 = vector.shape_cast %38 : vector<1xf32> to vector<1x1xf32>
    %40 = arith.addf %35, %39 : vector<1x1xf32>
    %c0_16 = arith.constant 0 : index
    %c0_17 = arith.constant 0 : index
    %41 = vector.load %arg7[%c0_16, %c0_17] : memref<1x1xf32, #tpu.memory_space<vmem>>, vector<1x1xf32>
    tpu.vector_store %arg7[%c0_16, %c0_17], %40 {strides = array<i32>} : memref<1x1xf32, #tpu.memory_space<vmem>>, vector<1x1xf32>,
    %c0_i32_18 = arith.constant 0 : i32
    %42 = arith.cmpi eq, %arg1, %c0_i32_18 : i32
    %43 = arith.extui %42 : i1 to i32
    %c0_i32_19 = arith.constant 0 : i32
    %44 = arith.cmpi ne, %43, %c0_i32_19 : i32
    scf.if %44 {
      %c0_20 = arith.constant 0 : index
      %c0_21 = arith.constant 0 : index
      %45 = vector.load %arg7[%c0_20, %c0_21] : memref<1x1xf32, #tpu.memory_space<vmem>>, vector<1x1xf32>
      %46 = vector.shape_cast %45 : vector<1x1xf32> to vector<1x1x1xf32>
      %47 = vector.shape_cast %46 : vector<1x1x1xf32> to vector<1x1x1xf32>
      %48 = vector.broadcast %47 : vector<1x1x1xf32> to vector<1x1x128xf32>
      %c0_22 = arith.constant 0 : index
      %c0_23 = arith.constant 0 : index
      %c0_24 = arith.constant 0 : index
      %49 = vector.load %arg6[%c0_22, %c0_23, %c0_24] : memref<1x1x128xf32, #tpu.memory_space<vmem>>, vector<1x1x128xf32>
      tpu.vector_store %arg6[%c0_22, %c0_23, %c0_24], %48 {strides = array<i32>} : memref<1x1x128xf32, #tpu.memory_space<vmem>>, vector<1x1x128xf32>,
    } else {
    }
    return
  }
  func.func @transform_0(%arg0: i32, %arg1: i32) -> (i32, i32) {
    %c1_i32 = arith.constant 1 : i32
    %0 = arith.muli %arg0, %c1_i32 : i32
    %1 = arith.addi %0, %arg1 : i32
    %c0_i32 = arith.constant 0 : i32
    %c0_i32_0 = arith.constant 0 : i32
    return %c0_i32, %1 : i32, i32
  }
  func.func @transform_1(%arg0: i32, %arg1: i32) -> (i32, i32) {
    %c0_i32 = arith.constant 0 : i32
    %c0_i32_0 = arith.constant 0 : i32
    %c0_i32_1 = arith.constant 0 : i32
    return %c0_i32, %c0_i32_0 : i32, i32
  }
  func.func @transform_2(%arg0: i32, %arg1: i32) -> (i32, i32) {
    %c0_i32 = arith.constant 0 : i32
    %c0_i32_0 = arith.constant 0 : i32
    %c0_i32_1 = arith.constant 0 : i32
    return %c0_i32, %c0_i32_0 : i32, i32
  }
  func.func @transform_3(%arg0: i32, %arg1: i32) -> (i32, i32) {
    %c1_i32 = arith.constant 1 : i32
    %0 = arith.muli %arg0, %c1_i32 : i32
    %1 = arith.addi %0, %arg1 : i32
    %c0_i32 = arith.constant 0 : i32
    %c0_i32_0 = arith.constant 0 : i32
    return %c0_i32, %1 : i32, i32
  }
  func.func @transform_4(%arg0: i32, %arg1: i32) -> (i32, i32, i32) {
    %c0_i32 = arith.constant 0 : i32
    %c0_i32_0 = arith.constant 0 : i32
    %c0_i32_1 = arith.constant 0 : i32
    return %arg0, %c0_i32, %c0_i32_0 : i32, i32, i32
  }
}

</mosaic_0001>

<llo_original>
// kernel: tpu_custom_call.1
$region0: #{tpu_custom_call.1}
  #allocation0 [shape = 'u32[]', space=smem, size = 0x4, offset = 0x4, fixed_abs, tag = 'smem constant byte address 0x4 - core index']
  #allocation1 [shape = 'u32[144,128]{1,0:T(1,128)}', space=vmem, size = 0x12000, scoped, tag = 'internal scratch']
  #allocation2 [shape = 'f32[1,1]{1,0:T(1,128)}', space=vmem, size = 0x200, scoped, tag = 'scratch operand']
  %s0 = inlined_call_operand.hbm [shape: f32[64,256], index: 0, kind: input, shape index: {}]
  %s1 = inlined_call_operand.vmem [shape: f32[16,64], index: 1, kind: input, shape index: {}]
  %s2 = inlined_call_operand.vmem [shape: f32[16,1], index: 2, kind: input, shape index: {}]
  %s3 = inlined_call_operand.vmem [shape: f32[1,256], index: 3, kind: input, shape index: {}]
  %s4 = inlined_call_operand.hbm [shape: f32[2,1,128], index: 4, kind: output, shape index: {}]
  %s5 = sld [smem:[#allocation0]]
  $region61: #{tpu_custom_call.1} parent=0
    _
  %s7 = ssub.s32 1, %s5
  %s8 = scalar_select 0, %s7, %s5
  $region1: #{tpu_custom_call.1} parent=0
    #allocation3 [shape = 'u8[65536]{0}', space=vmem, size = 0x10000, scoped, tag = 'input window, operand 0']
    #allocation4 [shape = 's32[2]{0}', space=sflag, size = 0x8, scoped, tag = 'scoped memory for tpu_custom_call.1']
    #allocation5 [shape = 's32[2]{0}', space=sflag, size = 0x8, scoped, tag = 'scoped memory for tpu_custom_call.1']
    #allocation6 [shape = 'u8[1024]{0}', space=vmem, size = 0x400, scoped, tag = 'output window, operand 0']
    %9 = vsyncpa [#allocation4], 0
    %s10 = scalar_lea.sflag [#allocation4], 1
    %11 = vsyncpa %s10, 0
    %12 = vsyncpa [#allocation5], 0
    %s13 = scalar_lea.sflag [#allocation5], 1
    %14 = vsyncpa %s13, 0
    loop: start=0, step=1, limit=4
    $region2: #{tpu_custom_call.1} parent=1 // loop_pre_header
      _
    $region3: #{tpu_custom_call.1} parent=1 // loop_header
      %s16 = sphi 0, %s20
      %p17 = scmp.ge.s32.totalorder %s16, 4
      %s23 = sphi 0, %s35
      %s24 = sphi 0, %s31
      %s25 = sphi 0, %s23
      %s26 = sphi 0, %s24
      %s27 = sphi 0, %s25
      %s28 = sphi 0, %s26
      %s40 = sphi 0, %s42
      %s43 = sphi 0, %s40
      %s44 = sphi 0, %s43
      %s60 = sphi 0, %s44
      %s64 = sphi 0, %s64
      %s66 = sphi 0, %s64
      %s67 = sphi 0, %s66
      %s81 = sphi 0, %s67
      %s85 = sphi 0, %s85
      %s87 = sphi 0, %s85
      %s88 = sphi 0, %s87
      %s102 = sphi 0, %s88
      %s110 = sphi 0, %s112
      %s113 = sphi 0, %s110
      %s114 = sphi 0, %s113
      %s130 = sphi 0, %s114
      %s136 = sphi 0, %s138
      %s139 = sphi 0, %s136
      %s140 = sphi 0, %s139
      %s156 = sphi 0, %s140
    $region4: #{tpu_custom_call.1} parent=1 // loop_header_branch
      %19 = sbr.rel (%p17) target = $region8
    $region5: #{tpu_custom_call.1} parent=1 // loop_body
      %s21 = ssub.s32 %s16, 1
      %s22 = ssub.s32 %s16, 2
      %s29 = sadd.s32 1, %s24
      %p30 = scmp.ge.s32.totalorder %s29, 1
      %s31 = scalar_select %p30, 0, %s29
      %s32 = sadd.s32 1, %s23
      %s33 = scalar_select %p30, %s32, %s23
      %p34 = scmp.ge.s32.totalorder %s33, 2
      %s35 = scalar_select %p34, 0, %s33
      %s36 = sadd.s32 %s23, %s24
      %s37 = sadd.s32 %s35, %s31
      %s38 = ssub.s32 %s36, %s37
      %p39 = scmp.eq.s32.totalorder %s38, 0
      %s41 = sadd.s32 %s40, 1
      %s42 = scalar_select %p39, %s40, %s41
      %p45 = pneg %p39
      %p46 = scmp.eq.s32.totalorder %s16, 1
      %p47 = por %p45, %p46
      %p48 = scmp.ne.s32.totalorder %s40, %s43
      %p49 = scmp.eq.s32.totalorder %s16, 0
      %p50 = por %p48, %p49
      %p51 = scmp.ne.s32.totalorder %s40, %s43
      %p52 = scmp.eq.s32.totalorder %s21, 1
      %p53 = por %p51, %p52
      %p54 = scmp.ne.s32.totalorder %s43, %s44
      %p55 = scmp.eq.s32.totalorder %s21, 0
      %p56 = por %p54, %p55
      %p57 = scmp.ne.s32.totalorder %s43, %s44
      %p58 = scmp.eq.s32.totalorder %s22, 1
      %p59 = por %p57, %p58
      %p61 = scmp.ne.s32.totalorder %s44, %s60
      %p62 = scmp.eq.s32.totalorder %s22, 0
      %p63 = por %p61, %p62
      %s65 = sadd.s32 %s64, 1
      %p68 = scmp.eq.s32.totalorder %s16, 1
      %p69 = scmp.ne.s32.totalorder %s64, %s66
      %p70 = scmp.eq.s32.totalorder %s16, 0
      %p71 = por %p69, %p70
      %p72 = scmp.ne.s32.totalorder %s64, %s66
      %p73 = scmp.eq.s32.totalorder %s21, 1
      %p74 = por %p72, %p73
      %p75 = scmp.ne.s32.totalorder %s66, %s67
      %p76 = scmp.eq.s32.totalorder %s21, 0
      %p77 = por %p75, %p76
      %p78 = scmp.ne.s32.totalorder %s66, %s67
      %p79 = scmp.eq.s32.totalorder %s22, 1
      %p80 = por %p78, %p79
      %p82 = scmp.ne.s32.totalorder %s67, %s81
      %p83 = scmp.eq.s32.totalorder %s22, 0
      %p84 = por %p82, %p83
      %s86 = sadd.s32 %s85, 1
      %p89 = scmp.eq.s32.totalorder %s16, 1
      %p90 = scmp.ne.s32.totalorder %s85, %s87
      %p91 = scmp.eq.s32.totalorder %s16, 0
      %p92 = por %p90, %p91
      %p93 = scmp.ne.s32.totalorder %s85, %s87
      %p94 = scmp.eq.s32.totalorder %s21, 1
      %p95 = por %p93, %p94
      %p96 = scmp.ne.s32.totalorder %s87, %s88
      %p97 = scmp.eq.s32.totalorder %s21, 0
      %p98 = por %p96, %p97
      %p99 = scmp.ne.s32.totalorder %s87, %s88
      %p100 = scmp.eq.s32.totalorder %s22, 1
      %p101 = por %p99, %p100
      %p103 = scmp.ne.s32.totalorder %s88, %s102
      %p104 = scmp.eq.s32.totalorder %s22, 0
      %p105 = por %p103, %p104
      %s106 = sadd.s32 %s23, %s24
      %s107 = sadd.s32 %s35, %s31
      %s108 = ssub.s32 %s106, %s107
      %p109 = scmp.eq.s32.totalorder %s108, 0
      %s111 = sadd.s32 %s110, 1
      %s112 = scalar_select %p109, %s110, %s111
      %p115 = pneg %p109
      %p116 = scmp.eq.s32.totalorder %s16, 1
      %p117 = por %p115, %p116
      %p118 = scmp.ne.s32.totalorder %s110, %s113
      %p119 = scmp.eq.s32.totalorder %s16, 0
      %p120 = por %p118, %p119
      %p121 = scmp.ne.s32.totalorder %s110, %s113
      %p122 = scmp.eq.s32.totalorder %s21, 1
      %p123 = por %p121, %p122
      %p124 = scmp.ne.s32.totalorder %s113, %s114
      %p125 = scmp.eq.s32.totalorder %s21, 0
      %p126 = por %p124, %p125
      %p127 = scmp.ne.s32.totalorder %s113, %s114
      %p128 = scmp.eq.s32.totalorder %s22, 1
      %p129 = por %p127, %p128
      %p131 = scmp.ne.s32.totalorder %s114, %s130
      %p132 = scmp.eq.s32.totalorder %s22, 0
      %p133 = por %p131, %p132
      %s134 = ssub.s32 %s23, %s35
      %p135 = scmp.eq.s32.totalorder %s134, 0
      %s137 = sadd.s32 %s136, 1
      %s138 = scalar_select %p135, %s136, %s137
      %p141 = pneg %p135
      %p142 = scmp.eq.s32.totalorder %s16, 1
      %p143 = por %p141, %p142
      %p144 = scmp.ne.s32.totalorder %s136, %s139
      %p145 = scmp.eq.s32.totalorder %s16, 0
      %p146 = por %p144, %p145
      %p147 = scmp.ne.s32.totalorder %s136, %s139
      %p148 = scmp.eq.s32.totalorder %s21, 1
      %p149 = por %p147, %p148
      %p150 = scmp.ne.s32.totalorder %s139, %s140
      %p151 = scmp.eq.s32.totalorder %s21, 0
      %p152 = por %p150, %p151
      %p153 = scmp.ne.s32.totalorder %s139, %s140
      %p154 = scmp.eq.s32.totalorder %s22, 1
      %p155 = por %p153, %p154
      %p157 = scmp.ne.s32.totalorder %s140, %s156
      %p158 = scmp.eq.s32.totalorder %s22, 0
      %p159 = por %p157, %p158
      %p160 = scmp.le.s32.totalorder 1, %s16
      %p161 = scmp.lt.s32.totalorder %s16, 3
      %p162 = pnand %p160, %p161
      %p163 = pneg %p162
      // Predicated region
      $region9: #{tpu_custom_call.1} parent=5 // pred_check
        _
      $region10: #{tpu_custom_call.1} parent=5 // pred_check_branch
        %165 = sbr.rel (%p162) target = $region12
      $region11: #{tpu_custom_call.1} parent=5 // pred_region
        %s166 = ssub.s32 %s16, 1
        // Predicated region
        $region13: #{tpu_custom_call.1} parent=11 // pred_check
          %p167 = pneg %p77
        $region14: #{tpu_custom_call.1} parent=11 // pred_check_branch
          %169 = sbr.rel (%p167) target = $region16
        $region15: #{tpu_custom_call.1} parent=11 // pred_region
          _
        $region16: #{tpu_custom_call.1} parent=11 // pred_fallthru
          _
        // Predicated region
        $region17: #{tpu_custom_call.1} parent=11 // pred_check
          %p170 = pneg %p98
        $region18: #{tpu_custom_call.1} parent=11 // pred_check_branch
          %172 = sbr.rel (%p170) target = $region20
        $region19: #{tpu_custom_call.1} parent=11 // pred_region
          _
        $region20: #{tpu_custom_call.1} parent=11 // pred_fallthru
          _
      $region12: #{tpu_custom_call.1} parent=5 // pred_fallthru
        _
      %p173 = scmp.lt.s32.totalorder %s16, 2
      // Predicated region
      $region21: #{tpu_custom_call.1} parent=5 // pred_check
        %p174 = pneg %p173
      $region22: #{tpu_custom_call.1} parent=5 // pred_check_branch
        %176 = sbr.rel (%p174) target = $region24
      $region23: #{tpu_custom_call.1} parent=5 // pred_region
        // Predicated region
        $region25: #{tpu_custom_call.1} parent=23 // pred_check
          %p177 = pneg %p50
        $region26: #{tpu_custom_call.1} parent=23 // pred_check_branch
          %179 = sbr.rel (%p177) target = $region28
        $region27: #{tpu_custom_call.1} parent=23 // pred_region
          %s180 = sand.u32 %s40, 1
          %s181 = scalar_lea.sflag [#allocation4], %s180
          %s182 = sand.u32 %s40, 1
          %s183 = smul.addr %s182, 64
          %s184 = scalar_lea.vmem [#allocation3], %s183
          %s185 = sadd.s32 %s23, %s24
          %s187 = ssub.s32 1024, 1024
          %188 = vsyncadd %s181, %s187
          %s189 = smul.addr %s185, 128
          %s190 = scalar_lea.hbm %s0, %s189
          %s191 = sshll.u32 %s184, 4
          %s192 = int_to_ptr.vmem [resolvable:$true] %s191
          %197 = dma.hbm_to_vmem [thread:$0]  %s190, 1024, %s192, %s181, 256, 128, 8
        $region28: #{tpu_custom_call.1} parent=23 // pred_fallthru
          _
        // Predicated region
        $region29: #{tpu_custom_call.1} parent=23 // pred_check
          %p198 = pneg %p120
        $region30: #{tpu_custom_call.1} parent=23 // pred_check_branch
          %200 = sbr.rel (%p198) target = $region32
        $region31: #{tpu_custom_call.1} parent=23 // pred_region
          %s201 = sadd.s32 %s23, %s24
          %p202 = scmp.lt.s32.totalorder %s201, 1
          %s203 = scalar_select %p202, %s201, 1
          %s204 = scalar_lea.vmem %s3, %s203
          %s205 = sadd.s32 %s23, %s24
        $region32: #{tpu_custom_call.1} parent=23 // pred_fallthru
          _
      $region24: #{tpu_custom_call.1} parent=5 // pred_fallthru
        _
      %p206 = scmp.le.s32.totalorder 1, %s16
      %p207 = scmp.lt.s32.totalorder %s16, 3
      %p208 = pnand %p206, %p207
      %p209 = pneg %p208
      // Predicated region
      $region33: #{tpu_custom_call.1} parent=5 // pred_check
        _
      $region34: #{tpu_custom_call.1} parent=5 // pred_check_branch
        %211 = sbr.rel (%p208) target = $region36
      $region35: #{tpu_custom_call.1} parent=5 // pred_region
        %s212 = ssub.s32 %s16, 1
        %s213 = sand.u32 %s43, 1
        %s214 = scalar_lea.sflag [#allocation4], %s213
        %s215 = sand.u32 %s43, 1
        %s216 = smul.addr %s215, 64
        %s217 = scalar_lea.vmem [#allocation3], %s216
        // Predicated region
        $region37: #{tpu_custom_call.1} parent=35 // pred_check
          %p218 = pneg %p56
        $region38: #{tpu_custom_call.1} parent=35 // pred_check_branch
          %220 = sbr.rel (%p218) target = $region40
        $region39: #{tpu_custom_call.1} parent=35 // pred_region
          %221 = dma.done %s214, 1024
        $region40: #{tpu_custom_call.1} parent=35 // pred_fallthru
          _
        %s222 = sand.u32 %s43, 1
        %s223 = scalar_lea.sflag [#allocation4], %s222
        %s224 = sand.u32 %s43, 1
        %s225 = smul.addr %s224, 64
        %s226 = scalar_lea.vmem [#allocation3], %s225
        %p227 = pneg %p56
        %p228 = pneg %p53
        %p229 = pneg %p77
        %p230 = pneg %p74
        %p231 = pneg %p98
        %p232 = pneg %p95
        %s233 = sadd.s32 %s25, %s26
        %p234 = scmp.lt.s32.totalorder %s233, 1
        %s235 = scalar_select %p234, %s233, 1
        %s236 = scalar_lea.vmem %s3, %s235
        %p237 = pneg %p126
        %p238 = pneg %p123
        %p239 = pneg %p152
        %p240 = pneg %p149
        %s241 = sand.u32 %s139, 1
        %s242 = scalar_lea.sflag [#allocation5], %s241
        %s243 = sand.u32 %s139, 1
        %s244 = scalar_lea.vmem [#allocation6], %s243
        %s245 = sadd.s32 %s25, %s26
        %s246 = sadd.s32 %s25, %s26
        %p247 = scmp.lt.s32.totalorder %s246, 1
        %s248 = scalar_select %p247, %s246, 1
        %s249 = scalar_lea.vmem %s3, %s248
        %s250 = sadd.s32 %s25, %s26
        %p251 = scmp.eq.s32.totalorder %s26, 0
        // Predicated region
        $region41: #{tpu_custom_call.1} parent=35 // pred_check
          %p252 = pneg %p251
        $region42: #{tpu_custom_call.1} parent=35 // pred_check_branch
          %254 = sbr.rel (%p252) target = $region44
        $region43: #{tpu_custom_call.1} parent=35 // pred_region
          %vm255 = vcmask 0
          %256 = vst.msk [vmem:[#allocation2] sm:$0x1] %vm255, 0.0
        $region44: #{tpu_custom_call.1} parent=35 // pred_fallthru
          _
        %v257 = vld [vmem:[%s1] sm:$0xff]
        %v258 = vld [vmem:[%s1 + $0x8] sm:$0xff]
        %v259 = vld [vmem:[%s217] sm:$0xff]
        %v260 = vld [vmem:[%s217 + $0x8] sm:$0xff]
        %v261 = vld [vmem:[%s217 + $0x10] sm:$0xff]
        %v262 = vld [vmem:[%s217 + $0x18] sm:$0xff]
        %v263 = vld [vmem:[%s217 + $0x20] sm:$0xff]
        %v264 = vld [vmem:[%s217 + $0x28] sm:$0xff]
        %v265 = vld [vmem:[%s217 + $0x30] sm:$0xff]
        %v266 = vld [vmem:[%s217 + $0x38] sm:$0xff]
        %v267 = vld [vmem:[%s2] sm:$0xff]
        %v268 = vld [vmem:[%s2 + $0x8] sm:$0xff]
        %270 = vset.pattern.permute.xlu0 0
        %271 = vperm.xlu0 %270, %v267
        %v272 = vpop.permute.xlu0 %271
        %275 = vset.pattern.permute.xlu0 0
        %276 = vperm.xlu0 %275, %v268
        %v277 = vpop.permute.xlu0 %276
        %vm279 = vcmask 523264
        %v281 = vsel %vm279, %v257, 0
        %v284 = vsel %vm279, %v258, 0
        %286 = vmatprep.subr.mxu0 0.0
        %287 = vmatpush1.msra.mxu0 %v259
        %288 = vmatprep.subr.mxu0 0.0
        %289 = vmatpush1.msra.mxu0 %v260
        %290 = vmatprep.subr.mxu0 0.0
        %291 = vmatpush1.msra.mxu0 %v261
        %292 = vmatprep.subr.mxu0 0.0
        %293 = vmatpush1.msra.mxu0 %v262
        %294 = vmatprep.subr.mxu0 0.0
        %295 = vmatpush1.msra.mxu0 %v263
        %296 = vmatprep.subr.mxu0 0.0
        %297 = vmatpush1.msra.mxu0 %v264
        %298 = vmatprep.subr.mxu0 0.0
        %299 = vmatpush1.msra.mxu0 %v265
        %300 = vmatprep.subr.mxu0 0.0
        %301 = vmatpush1.msra.mxu0 %v266
        %302 = vmatprep.subr.mxu0 0.0
        %303 = vmatpush1.msra.mxu0 0.0
        %304 = vmatprep.subr.mxu0 0.0
        %305 = vmatpush1.msra.mxu0 0.0
        %306 = vmatprep.subr.mxu0 0.0
        %307 = vmatpush1.msra.mxu0 0.0
        %308 = vmatprep.subr.mxu0 0.0
        %309 = vmatpush1.msra.mxu0 0.0
        %310 = vmatprep.subr.mxu0 0.0
        %311 = vmatpush1.msra.mxu0 0.0
        %312 = vmatprep.subr.mxu0 0.0
        %313 = vmatpush1.msra.mxu0 0.0
        %314 = vmatprep.subr.mxu0 0.0
        %315 = vmatpush1.msra.mxu0 0.0
        %316 = vmatprep.subr.mxu0 0.0
        %317 = vmatpush1.msra.mxu0 0.0
        %318 = vmatprep.subr.mxu0 0.0
        %319 = vmatpush1.msra.mxu0 0.0
        %320 = vmatprep.subr.mxu0 0.0
        %321 = vmatpush1.msra.mxu0 0.0
        %322 = vmatprep.subr.mxu0 0.0
        %323 = vmatpush1.msra.mxu0 0.0
        %324 = vmatprep.subr.mxu0 0.0
        %325 = vmatpush1.msra.mxu0 0.0
        %326 = vmatprep.subr.mxu0 0.0
        %327 = vmatpush1.msra.mxu0 0.0
        %328 = vmatprep.subr.mxu0 0.0
        %329 = vmatpush1.msra.mxu0 0.0
        %330 = vmatprep.subr.mxu0 0.0
        %331 = vmatpush1.msra.mxu0 0.0
        %332 = vmatprep.subr.mxu0 0.0
        %333 = vmatpush1.msra.mxu0 0.0
        %334 = vmatprep.subr.mxu0 0.0
        %335 = vmatpush1.msra.mxu0 0.0
        %336 = vmatprep.subr.mxu0 0.0
        %337 = vmatpush1.msra.mxu0 0.0
        %338 = vmatprep.subr.mxu0 0.0
        %339 = vmatpush1.msra.mxu0 0.0
        %340 = vmatprep.subr.mxu0 0.0
        %341 = vmatpush1.msra.mxu0 0.0
        %342 = vmatprep.subr.mxu0 0.0
        %343 = vmatpush1.msra.mxu0 0.0
        %344 = vmatprep.subr.mxu0 0.0
        %345 = vmatpush1.msra.mxu0 0.0
        %346 = vmatprep.subr.mxu0 0.0
        %347 = vmatpush1.msra.mxu0 0.0
        %348 = vmatprep.subr.mxu0 0.0
        %349 = vmatpush1.msra.mxu0 0.0
        %350 = vmatprep.mubr.f32.mxu0 0.0
        %351 = vmatmul.mubr.f32.gmra.mrb[0].mxu0 %v281
        %v352 = vpop.f32.mrb[0].mxu0
        %v353 = vadd.f32 %v272, %v352
        %v354 = vpop.f32.mrb[0].mxu0
        %355 = vmatprep.mubr.f32.mxu0 0.0
        %356 = vmatmul.mubr.f32.gmra.mrb[0].mxu0 %v284
        %v357 = vpop.f32.mrb[0].mxu0
        %v358 = vadd.f32 %v277, %v357
        %v359 = vpop.f32.mrb[0].mxu0
        %360 = vdwg.mxu0
        %v361 = vrot.slane %v353, 4
        %v362 = vmax.f32 %v353, %v361
        %v363 = vrot.slane %v362, 2
        %v364 = vmax.f32 %v362, %v363
        %v365 = vrot.slane %v364, 1
        %v366 = vmax.f32 %v364, %v365
        %v367 = vsub.f32 %v353, %v366
        %v368 = vrot.slane %v358, 4
        %v369 = vmax.f32 %v358, %v368
        %v370 = vrot.slane %v369, 2
        %v371 = vmax.f32 %v369, %v370
        %v372 = vrot.slane %v371, 1
        %v373 = vmax.f32 %v371, %v372
        %v374 = vsub.f32 %v358, %v373
        %v375 = vmul.f32 %v367, 1.442695
        %v376 = vpow.pop %v375
        %v377 = vmul.f32 %v374, 1.442695
        %v378 = vpow.pop %v377
        %v379 = vrot.slane %v376, 4
        %v380 = vadd.f32 %v376, %v379
        %v381 = vrot.slane %v380, 2
        %v382 = vadd.f32 %v380, %v381
        %v383 = vrot.slane %v382, 1
        %v384 = vadd.f32 %v382, %v383
        %v385 = vrot.slane %v378, 4
        %v386 = vadd.f32 %v378, %v385
        %v387 = vrot.slane %v386, 2
        %v388 = vadd.f32 %v386, %v387
        %v389 = vrot.slane %v388, 1
        %v390 = vadd.f32 %v388, %v389
        %v391 = vrcp.pop %v384
        %v392 = vmul.f32 %v376, %v391
        %v393 = vrcp.pop %v390
        %v394 = vmul.f32 %v378, %v393
        %v395 = vsub.f32 %v392, %v394
        %v396 = vmul.f32 %v395, %v395
        %v397 = vrot.slane %v396, 4
        %v398 = vadd.f32 %v396, %v397
        %v399 = vrot.slane %v398, 2
        %v400 = vadd.f32 %v398, %v399
        %v401 = vrot.slane %v400, 1
        %v402 = vadd.f32 %v400, %v401
        %v403 = vld [vmem:[#allocation2] sm:$0x1]
        %v404 = vld [vmem:[%s249] sm:$0x1]
        %v405 = vmul.f32 %v402, %v404
        %vm406 = vcmask 1040384
        %v407 = vsel %vm406, %v405, 0.0
        %408 = vadd.xlane.f32.xlu0 %v407
        %v409 = vpop.xlane.xlu0 %408
        %v410 = vadd.f32 %v403, %v409
        %vm411 = vcmask 0
        %412 = vst.msk [vmem:[#allocation2] sm:$0x1] %vm411, %v410
        // Predicated region
        $region45: #{tpu_custom_call.1} parent=35 // pred_check
          %p413 = pneg %p251
        $region46: #{tpu_custom_call.1} parent=35 // pred_check_branch
          %415 = sbr.rel (%p413) target = $region48
        $region47: #{tpu_custom_call.1} parent=35 // pred_region
          %v416 = vld [vmem:[#allocation2] sm:$0x1]
          %418 = vset.pattern.permute.xlu0 0
          %419 = vperm.xlu0 %418, %v416
          %v420 = vpop.permute.xlu0 %419
          %v422 = vlaneseq
          %v423 = vshrl.u32 %v422, 7
          %v424 = vsub.s32 0, %v423
          %v425 = vrot.slane %v420, %v424
          %426 = vst [vmem:[%s244] sm:$0x1] %v425
        $region48: #{tpu_custom_call.1} parent=35 // pred_fallthru
          _
        %s427 = sand.u32 %s139, 1
        %s428 = scalar_lea.sflag [#allocation5], %s427
        %s429 = sand.u32 %s139, 1
        %s430 = scalar_lea.vmem [#allocation6], %s429
        // Predicated region
        $region49: #{tpu_custom_call.1} parent=35 // pred_check
          %p431 = pneg %p149
        $region50: #{tpu_custom_call.1} parent=35 // pred_check_branch
          %433 = sbr.rel (%p431) target = $region52
        $region51: #{tpu_custom_call.1} parent=35 // pred_region
          %s435 = ssub.s32 16, 16
          %436 = vsyncadd %s428, %s435
          %s437 = smul.addr %s25, 16
          %s438 = scalar_lea.hbm %s4, %s437
          %s440 = sshll.u32 %s430, 4
          %s441 = int_to_ptr.vmem [resolvable:$true] %s440
          %443 = dma.vmem_to_hbm [thread:$0]  %s441, 16, %s438, %s428
        $region52: #{tpu_custom_call.1} parent=35 // pred_fallthru
          _
      $region36: #{tpu_custom_call.1} parent=5 // pred_fallthru
        _
      %p444 = scmp.le.s32.totalorder 2, %s16
      // Predicated region
      $region53: #{tpu_custom_call.1} parent=5 // pred_check
        %p445 = pneg %p444
      $region54: #{tpu_custom_call.1} parent=5 // pred_check_branch
        %447 = sbr.rel (%p445) target = $region56
      $region55: #{tpu_custom_call.1} parent=5 // pred_region
        %s448 = ssub.s32 %s16, 2
        // Predicated region
        $region57: #{tpu_custom_call.1} parent=55 // pred_check
          %p449 = pneg %p155
        $region58: #{tpu_custom_call.1} parent=55 // pred_check_branch
          %451 = sbr.rel (%p449) target = $region60
        $region59: #{tpu_custom_call.1} parent=55 // pred_region
          %s452 = sand.u32 %s140, 1
          %s453 = scalar_lea.sflag [#allocation5], %s452
          %s454 = sand.u32 %s140, 1
          %s455 = scalar_lea.vmem [#allocation6], %s454
          %456 = dma.done %s453, 16
        $region60: #{tpu_custom_call.1} parent=55 // pred_fallthru
          _
      $region56: #{tpu_custom_call.1} parent=5 // pred_fallthru
        _
    $region6: #{tpu_custom_call.1} parent=1 // loop_footer
      %s20 = sadd.s32 1, %s16
    $region7: #{tpu_custom_call.1} parent=1 // loop_footer_branch
      %15 = sbr.rel target = $region3
    $region8: #{tpu_custom_call.1} parent=1 // loop_exit
      _
    %457 = vsyncpa [#allocation4], 1
    %s458 = scalar_lea.sflag [#allocation4], 1
    %459 = vsyncpa %s458, 1
    %460 = vsyncpa [#allocation5], 1
    %s461 = scalar_lea.sflag [#allocation5], 1
    %462 = vsyncpa %s461, 1

</llo_original>
